<compile_context>
chip_gen: v5e
topology: v5e:2x2
jax: 0.10.0
libtpu: 0.0.40
codegen_flags: <defaults>
</compile_context>

<pallas_src>
import jax
import jax.numpy as jnp
from jax.experimental import pallas as pl
from jax.experimental.pallas import tpu as pltpu


def _round_up(x, m):
    return ((x + m - 1) // m) * m


def stacked_attention_1d_kernel(a_ref, u_ref,
                                wa_ref, wu_ref, b_au_ref,
                                wp_ref, bp_ref,
                                out_ref):
    a = a_ref[...]                                   # [T, D] f32
    u = u_ref[...]                                   # [T, D] f32
    mm_dtype = wa_ref.dtype                          # bf16 (or f32) matmul operands

    # Projections on the MXU, f32 accumulation; biases pre-folded (b_au = ba + bu).
    a_proj = jnp.dot(a.astype(mm_dtype), wa_ref[...],
                     preferred_element_type=jnp.float32)
    u_proj = jnp.dot(u.astype(mm_dtype), wu_ref[...],
                     preferred_element_type=jnp.float32)
    h = jnp.tanh(a_proj + u_proj + b_au_ref[...])    # [T, H] f32

    # logits = h @ Wp^T + bp ; softmax over the feature axis (dim=1 of the N x D view)
    logits = jnp.dot(h.astype(mm_dtype), wp_ref[...],
                     preferred_element_type=jnp.float32) + bp_ref[...]
    m = jnp.max(logits, axis=1, keepdims=True)
    e = jnp.exp(logits - m)
    p = e * pl.reciprocal(jnp.sum(e, axis=1, keepdims=True), approx=True)

    # next_u = p * a + u   (gating in f32)
    out_ref[...] = (p * a + u).astype(out_ref.dtype)


def stacked_attention_1d(a, u, wa_t, ba, wu_t, bu, wp_t, bp,
                         *, tile_n=512, matmul_dtype=jnp.bfloat16):
    """a, u: [..., D]; weights stored transposed vs torch.nn.Linear ([in, out])."""
    D = a.shape[-1]
    H = wa_t.shape[-1]
    orig_shape = a.shape

    # Fold all leading axes into rows (one pallas_call for the whole batch).
    a2 = a.reshape(-1, D)
    u2 = u.reshape(-1, D)
    n_rows = a2.shape[0]

    mm_dtype = a.dtype if matmul_dtype is None else matmul_dtype
    wa = wa_t.astype(mm_dtype)
    wu = wu_t.astype(mm_dtype)
    wp = wp_t.astype(mm_dtype)
    b_au = (ba.reshape(1, H) + bu.reshape(1, H)).astype(jnp.float32)  # folded bias
    bp2 = bp.reshape(1, D).astype(jnp.float32)

    # Row tile: multiple of 8 sublanes; pad rows so the grid divides evenly.
    tile = _round_up(min(tile_n, _round_up(n_rows, 8)), 8)
    n_pad = _round_up(n_rows, tile)
    if n_pad != n_rows:
        pad = n_pad - n_rows
        a2 = jnp.pad(a2, ((0, pad), (0, 0)))
        u2 = jnp.pad(u2, ((0, pad), (0, 0)))

    row_block = lambda: pl.BlockSpec((tile, D), lambda i: (i, 0))
    # Constant index map -> weights/biases stay resident in VMEM across grid steps.
    resident = lambda arr: pl.BlockSpec(arr.shape, lambda i: (0, 0))

    out = pl.pallas_call(
        stacked_attention_1d_kernel,
        out_shape=jax.ShapeDtypeStruct((n_pad, D), a.dtype),
        grid=(n_pad // tile,),
        in_specs=[row_block(), row_block(),
                  resident(wa), resident(wu), resident(b_au),
                  resident(wp), resident(bp2)],
        out_specs=pl.BlockSpec((tile, D), lambda i: (i, 0)),
        input_output_aliases={1: 0},   # next_u may reuse u's buffer
        compiler_params=pltpu.CompilerParams(
            dimension_semantics=("parallel",),       # shard rows across v7x TCs
            vmem_limit_bytes=32 * 1024 * 1024,       # sized for v7x scoped VMEM
        ),
    )(a2, u2, wa, wu, b_au, wp, bp2)

    if n_pad != n_rows:
        out = out[:n_rows]
    return out.reshape(orig_shape)


def reference(a, u, wa_t, ba, wu_t, bu, wp_t, bp):
    a_proj = a @ wa_t + ba
    u_proj = u @ wu_t + bu
    h = jnp.tanh(a_proj + u_proj)
    p = jax.nn.softmax(h @ wp_t + bp, axis=-1)
    return p * a + u


if __name__ == "__main__":
    N, D, H = 8, 32, 64     # batch rows, input_dim, hidden_dim

    key = jax.random.PRNGKey(0)
    keys = jax.random.split(key, 10)

    a = jax.random.normal(keys[0], (N, D), dtype=jnp.float32)
    u = jax.random.normal(keys[1], (N, D), dtype=jnp.float32)

    # Linear weights stored transposed: [in, out]; biases kept 2-D.
    wa_t = jax.random.normal(keys[2], (D, H), dtype=jnp.float32) * 0.1
    ba   = jax.random.normal(keys[3], (1, H), dtype=jnp.float32) * 0.1
    wu_t = jax.random.normal(keys[4], (D, H), dtype=jnp.float32) * 0.1
    bu   = jax.random.normal(keys[5], (1, H), dtype=jnp.float32) * 0.1
    wp_t = jax.random.normal(keys[6], (H, D), dtype=jnp.float32) * 0.1
    bp   = jax.random.normal(keys[7], (1, D), dtype=jnp.float32) * 0.1

    # --- Test 1: original tiny [8, 32] problem, f32 matmul path, single tile. ---
    ref = reference(a, u, wa_t, ba, wu_t, bu, wp_t, bp)
    out = stacked_attention_1d(a, u, wa_t, ba, wu_t, bu, wp_t, bp,
                               matmul_dtype=None)
    out = jax.block_until_ready(out)
    assert out.shape == (N, D)
    # approx reciprocal in the softmax denominator -> ~2^-12 relative error
    assert jnp.allclose(out, ref, atol=5e-3, rtol=5e-3)

    # --- Test 2: batched 3-D input, bf16 matmul operands, multi-step grid + padding. ---
    B, T = 5, 77            # 385 rows -> tile 128 -> grid of 4 with padding
    ab = jax.random.normal(keys[8], (B, T, D), dtype=jnp.float32)
    ub = jax.random.normal(keys[9], (B, T, D), dtype=jnp.float32)
    refb = reference(ab, ub, wa_t, ba, wu_t, bu, wp_t, bp)
    outb = stacked_attention_1d(ab, ub, wa_t, ba, wu_t, bu, wp_t, bp,
                                tile_n=128, matmul_dtype=jnp.bfloat16)
    outb = jax.block_until_ready(outb)
    assert outb.shape == (B, T, D)
    assert jnp.allclose(outb, refb, atol=3e-2, rtol=3e-2)

    print("KERNEL_OK")
</pallas_src>

<mosaic_0001>
module attributes {stable_mosaic.version = 11 : i64} {
  func.func @stacked_attention_1d_kernel(%arg0: i32, %arg1: memref<8x32xf32, #tpu.memory_space<vmem>>, %arg2: memref<8x32xf32, #tpu.memory_space<vmem>>, %arg3: memref<32x64xf32, #tpu.memory_space<vmem>>, %arg4: memref<32x64xf32, #tpu.memory_space<vmem>>, %arg5: memref<1x64xf32, #tpu.memory_space<vmem>>, %arg6: memref<64x32xf32, #tpu.memory_space<vmem>>, %arg7: memref<1x32xf32, #tpu.memory_space<vmem>>, %arg8: memref<8x32xf32, #tpu.memory_space<vmem>>) attributes {dimension_semantics = [#tpu.dimension_semantics<parallel>], iteration_bounds = array<i64: 1>, scalar_prefetch = 0 : i64, scratch_operands = 0 : i64, tpu.core_type = #tpu.core_type<tc>, window_params = [{transform_indices = @transform_0, window_bounds = array<i64: 8, 32>}, {transform_indices = @transform_1, window_bounds = array<i64: 8, 32>}, {pipeline_mode = #tpu.pipeline_mode<synchronous>, transform_indices = @transform_2, window_bounds = array<i64: 32, 64>}, {pipeline_mode = #tpu.pipeline_mode<synchronous>, transform_indices = @transform_3, window_bounds = array<i64: 32, 64>}, {pipeline_mode = #tpu.pipeline_mode<synchronous>, transform_indices = @transform_4, window_bounds = array<i64: 1, 64>}, {pipeline_mode = #tpu.pipeline_mode<synchronous>, transform_indices = @transform_5, window_bounds = array<i64: 64, 32>}, {pipeline_mode = #tpu.pipeline_mode<synchronous>, transform_indices = @transform_6, window_bounds = array<i64: 1, 32>}, {transform_indices = @transform_7, window_bounds = array<i64: 8, 32>}]} {
    %c0 = arith.constant 0 : index
    %c0_0 = arith.constant 0 : index
    %0 = vector.load %arg1[%c0, %c0_0] : memref<8x32xf32, #tpu.memory_space<vmem>>, vector<8x32xf32>
    %c0_1 = arith.constant 0 : index
    %c0_2 = arith.constant 0 : index
    %1 = vector.load %arg2[%c0_1, %c0_2] : memref<8x32xf32, #tpu.memory_space<vmem>>, vector<8x32xf32>
    %c0_3 = arith.constant 0 : index
    %c0_4 = arith.constant 0 : index
    %2 = vector.load %arg3[%c0_3, %c0_4] : memref<32x64xf32, #tpu.memory_space<vmem>>, vector<32x64xf32>
    %cst = arith.constant dense<0.000000e+00> : vector<8x64xf32>
    %3 = tpu.matmul %0, %2, %cst {dimension_numbers = #tpu.dot_dimension_numbers<[1], [0], [0], [1], [0, 0, 1, 1], [], []>} : vector<8x32xf32>, vector<32x64xf32>, vector<8x64xf32> -> vector<8x64xf32>
    %c0_5 = arith.constant 0 : index
    %c0_6 = arith.constant 0 : index
    %4 = vector.load %arg4[%c0_5, %c0_6] : memref<32x64xf32, #tpu.memory_space<vmem>>, vector<32x64xf32>
    %cst_7 = arith.constant dense<0.000000e+00> : vector<8x64xf32>
    %5 = tpu.matmul %1, %4, %cst_7 {dimension_numbers = #tpu.dot_dimension_numbers<[1], [0], [0], [1], [0, 0, 1, 1], [], []>} : vector<8x32xf32>, vector<32x64xf32>, vector<8x64xf32> -> vector<8x64xf32>
    %6 = arith.addf %3, %5 : vector<8x64xf32>
    %c0_8 = arith.constant 0 : index
    %c0_9 = arith.constant 0 : index
    %7 = vector.load %arg5[%c0_8, %c0_9] : memref<1x64xf32, #tpu.memory_space<vmem>>, vector<1x64xf32>
    %8 = vector.broadcast %7 : vector<1x64xf32> to vector<8x64xf32>
    %9 = arith.addf %6, %8 : vector<8x64xf32>
    %10 = math.tanh %9 : vector<8x64xf32>
    %c0_10 = arith.constant 0 : index
    %c0_11 = arith.constant 0 : index
    %11 = vector.load %arg6[%c0_10, %c0_11] : memref<64x32xf32, #tpu.memory_space<vmem>>, vector<64x32xf32>
    %cst_12 = arith.constant dense<0.000000e+00> : vector<8x32xf32>
    %12 = tpu.matmul %10, %11, %cst_12 {dimension_numbers = #tpu.dot_dimension_numbers<[1], [0], [0], [1], [0, 0, 1, 1], [], []>} : vector<8x64xf32>, vector<64x32xf32>, vector<8x32xf32> -> vector<8x32xf32>
    %c0_13 = arith.constant 0 : index
    %c0_14 = arith.constant 0 : index
    %13 = vector.load %arg7[%c0_13, %c0_14] : memref<1x32xf32, #tpu.memory_space<vmem>>, vector<1x32xf32>
    %14 = vector.broadcast %13 : vector<1x32xf32> to vector<8x32xf32>
    %15 = arith.addf %12, %14 : vector<8x32xf32>
    %cst_15 = arith.constant dense<0xFF800000> : vector<8xf32>
    %16 = vector.multi_reduction <maximumf>, %15, %cst_15 [1] : vector<8x32xf32> to vector<8xf32>
    %17 = vector.shape_cast %16 : vector<8xf32> to vector<8x1xf32>
    %18 = vector.broadcast %17 : vector<8x1xf32> to vector<8x32xf32>
    %19 = arith.subf %15, %18 : vector<8x32xf32>
    %20 = math.exp %19 : vector<8x32xf32>
    %cst_16 = arith.constant dense<0.000000e+00> : vector<8xf32>
    %21 = vector.multi_reduction <add>, %20, %cst_16 [1] : vector<8x32xf32> to vector<8xf32>
    %22 = vector.shape_cast %21 : vector<8xf32> to vector<8x1xf32>
    %23 = tpu.reciprocal %22 {approx = true} : vector<8x1xf32> -> vector<8x1xf32>
    %24 = vector.broadcast %23 : vector<8x1xf32> to vector<8x32xf32>
    %25 = arith.mulf %20, %24 : vector<8x32xf32>
    %26 = arith.mulf %25, %0 : vector<8x32xf32>
    %27 = arith.addf %26, %1 : vector<8x32xf32>
    %c0_17 = arith.constant 0 : index
    %c0_18 = arith.constant 0 : index
    %28 = vector.load %arg8[%c0_17, %c0_18] : memref<8x32xf32, #tpu.memory_space<vmem>>, vector<8x32xf32>
    tpu.vector_store %arg8[%c0_17, %c0_18], %27 {strides = array<i32>} : memref<8x32xf32, #tpu.memory_space<vmem>>, vector<8x32xf32>,
    return
  }
  func.func @transform_0(%arg0: i32) -> (i32, i32) {
    %c0_i32 = arith.constant 0 : i32
    %c0_i32_0 = arith.constant 0 : i32
    return %arg0, %c0_i32 : i32, i32
  }
  func.func @transform_1(%arg0: i32) -> (i32, i32) {
    %c0_i32 = arith.constant 0 : i32
    %c0_i32_0 = arith.constant 0 : i32
    return %arg0, %c0_i32 : i32, i32
  }
  func.func @transform_2(%arg0: i32) -> (i32, i32) {
    %c0_i32 = arith.constant 0 : i32
    %c0_i32_0 = arith.constant 0 : i32
    %c0_i32_1 = arith.constant 0 : i32
    return %c0_i32, %c0_i32_0 : i32, i32
  }
  func.func @transform_3(%arg0: i32) -> (i32, i32) {
    %c0_i32 = arith.constant 0 : i32
    %c0_i32_0 = arith.constant 0 : i32
    %c0_i32_1 = arith.constant 0 : i32
    return %c0_i32, %c0_i32_0 : i32, i32
  }
  func.func @transform_4(%arg0: i32) -> (i32, i32) {
    %c0_i32 = arith.constant 0 : i32
    %c0_i32_0 = arith.constant 0 : i32
    %c0_i32_1 = arith.constant 0 : i32
    return %c0_i32, %c0_i32_0 : i32, i32
  }
  func.func @transform_5(%arg0: i32) -> (i32, i32) {
    %c0_i32 = arith.constant 0 : i32
    %c0_i32_0 = arith.constant 0 : i32
    %c0_i32_1 = arith.constant 0 : i32
    return %c0_i32, %c0_i32_0 : i32, i32
  }
  func.func @transform_6(%arg0: i32) -> (i32, i32) {
    %c0_i32 = arith.constant 0 : i32
    %c0_i32_0 = arith.constant 0 : i32
    %c0_i32_1 = arith.constant 0 : i32
    return %c0_i32, %c0_i32_0 : i32, i32
  }
  func.func @transform_7(%arg0: i32) -> (i32, i32) {
    %c0_i32 = arith.constant 0 : i32
    %c0_i32_0 = arith.constant 0 : i32
    return %arg0, %c0_i32 : i32, i32
  }
}

</mosaic_0001>

<llo_original>
// kernel: tpu_custom_call.1
$region0: #{tpu_custom_call.1}
  #allocation0 [shape = 'u32[]', space=smem, size = 0x4, offset = 0x4, fixed_abs, tag = 'smem constant byte address 0x4 - core index']
  #allocation1 [shape = 'u32[72,128]{1,0:T(1,128)}', space=vmem, size = 0x9000, scoped, tag = 'internal scratch']
  %s0 = inlined_call_operand.vmem [shape: f32[8,32], index: 0, kind: input, shape index: {}]
  %s1 = inlined_call_operand.hbm [shape: f32[8,32], index: 1, kind: input, shape index: {}, may-alias: {1,7}]
  %s2 = inlined_call_operand.vmem [shape: f32[32,64], index: 2, kind: input, shape index: {}]
  %s3 = inlined_call_operand.vmem [shape: f32[32,64], index: 3, kind: input, shape index: {}]
  %s4 = inlined_call_operand.vmem [shape: f32[1,64], index: 4, kind: input, shape index: {}]
  %s5 = inlined_call_operand.vmem [shape: f32[64,32], index: 5, kind: input, shape index: {}]
  %s6 = inlined_call_operand.vmem [shape: f32[1,32], index: 6, kind: input, shape index: {}]
  %s7 = inlined_call_operand.hbm [shape: f32[8,32], index: 7, kind: output, shape index: {}, may-alias: {1,7}]
  %s8 = sld [smem:[#allocation0]]
  $region42: #{tpu_custom_call.1} parent=0
    _
  %s10 = ssub.s32 1, %s8
  %s11 = scalar_select 0, %s10, %s8
  $region1: #{tpu_custom_call.1} parent=0
    #allocation2 [shape = 'u8[4096]{0}', space=vmem, size = 0x1000, scoped, tag = 'input window, operand 1, single buffered']
    #allocation3 [shape = 's32[1]{0}', space=sflag, size = 0x4, scoped, tag = 'scoped memory for tpu_custom_call.1']
    #allocation4 [shape = 's32[1]{0}', space=sflag, size = 0x4, scoped, tag = 'scoped memory for tpu_custom_call.1']
    #allocation5 [shape = 'u8[4096]{0}', space=vmem, size = 0x1000, scoped, tag = 'output window, operand 0, single buffered']
    %12 = vsyncpa [#allocation3], 0
    %13 = vsyncpa [#allocation4], 0
    // Predicated region
    $region2: #{tpu_custom_call.1} parent=1 // pred_check
      _
    $region3: #{tpu_custom_call.1} parent=1 // pred_check_branch
      %15 = sbr.rel (0) target = $region5
    $region4: #{tpu_custom_call.1} parent=1 // pred_region
      _
    $region5: #{tpu_custom_call.1} parent=1 // pred_fallthru
      _
    // Predicated region
    $region6: #{tpu_custom_call.1} parent=1 // pred_check
      _
    $region7: #{tpu_custom_call.1} parent=1 // pred_check_branch
      %17 = sbr.rel (0) target = $region9
    $region8: #{tpu_custom_call.1} parent=1 // pred_region
      %19 = vsyncadd [#allocation3], 0
      %s21 = sshll.u32 %s1, 4
      %s22 = int_to_ptr.hbm [resolvable:$true] %s21
      %s23 = sshll.u32 [#allocation2], 4
      %s24 = int_to_ptr.vmem [resolvable:$true] %s23
      %26 = dma.hbm_to_vmem [thread:$0]  %s22, 128, %s24, [#allocation3]
    $region9: #{tpu_custom_call.1} parent=1 // pred_fallthru
      _
    // Predicated region
    $region10: #{tpu_custom_call.1} parent=1 // pred_check
      _
    $region11: #{tpu_custom_call.1} parent=1 // pred_check_branch
      %28 = sbr.rel (0) target = $region13
    $region12: #{tpu_custom_call.1} parent=1 // pred_region
      _
    $region13: #{tpu_custom_call.1} parent=1 // pred_fallthru
      _
    // Predicated region
    $region14: #{tpu_custom_call.1} parent=1 // pred_check
      _
    $region15: #{tpu_custom_call.1} parent=1 // pred_check_branch
      %30 = sbr.rel (0) target = $region17
    $region16: #{tpu_custom_call.1} parent=1 // pred_region
      _
    $region17: #{tpu_custom_call.1} parent=1 // pred_fallthru
      _
    // Predicated region
    $region18: #{tpu_custom_call.1} parent=1 // pred_check
      _
    $region19: #{tpu_custom_call.1} parent=1 // pred_check_branch
      %32 = sbr.rel (0) target = $region21
    $region20: #{tpu_custom_call.1} parent=1 // pred_region
      _
    $region21: #{tpu_custom_call.1} parent=1 // pred_fallthru
      _
    // Predicated region
    $region22: #{tpu_custom_call.1} parent=1 // pred_check
      _
    $region23: #{tpu_custom_call.1} parent=1 // pred_check_branch
      %34 = sbr.rel (0) target = $region25
    $region24: #{tpu_custom_call.1} parent=1 // pred_region
      _
    $region25: #{tpu_custom_call.1} parent=1 // pred_fallthru
      _
    // Predicated region
    $region26: #{tpu_custom_call.1} parent=1 // pred_check
      _
    $region27: #{tpu_custom_call.1} parent=1 // pred_check_branch
      %36 = sbr.rel (0) target = $region29
    $region28: #{tpu_custom_call.1} parent=1 // pred_region
      _
    $region29: #{tpu_custom_call.1} parent=1 // pred_fallthru
      _
    // Predicated region
    $region30: #{tpu_custom_call.1} parent=1 // pred_check
      _
    $region31: #{tpu_custom_call.1} parent=1 // pred_check_branch
      %38 = sbr.rel (0) target = $region33
    $region32: #{tpu_custom_call.1} parent=1 // pred_region
      %40 = dma.done [#allocation3], 128
    $region33: #{tpu_custom_call.1} parent=1 // pred_fallthru
      _
    %v41 = vld [vmem:[%s0] sm:$0xff]
    %v42 = vld [vmem:[#allocation2] sm:$0xff]
    %v43 = vld [vmem:[%s2] sm:$0xff]
    %v44 = vld [vmem:[%s2 + $0x8] sm:$0xff]
    %v45 = vld [vmem:[%s2 + $0x10] sm:$0xff]
    %v46 = vld [vmem:[%s2 + $0x18] sm:$0xff]
    %v47 = vld [vmem:[%s3] sm:$0xff]
    %v48 = vld [vmem:[%s3 + $0x8] sm:$0xff]
    %v49 = vld [vmem:[%s3 + $0x10] sm:$0xff]
    %v50 = vld [vmem:[%s3 + $0x18] sm:$0xff]
    %vm51 = vcmask 261120
    %v53 = vsel %vm51, %v42, 0
    %55 = vmatpush.msra.mxu0 0.0
    %56 = vmatpush.msra.mxu0 0.0
    %57 = vmatpush.msra.mxu0 0.0
    %58 = vmatpush.msra.mxu0 0.0
    %59 = vmatpush.msra.mxu0 0.0
    %60 = vmatpush.msra.mxu0 0.0
    %61 = vmatpush.msra.mxu0 0.0
    %62 = vmatpush.msra.mxu0 0.0
    %63 = vmatpush.msra.mxu0 0.0
    %64 = vmatpush.msra.mxu0 0.0
    %65 = vmatpush.msra.mxu0 0.0
    %66 = vmatpush.msra.mxu0 0.0
    %67 = vmatpush.msra.mxu0 %v50
    %68 = vmatpush.msra.mxu0 %v49
    %69 = vmatpush.msra.mxu0 %v48
    %70 = vmatpush.msra.mxu0 %v47
    %71 = vmatmul.f32.gmra.mxu0 %v53
    %v72 = vpop.f32.mrf.mxu0
    %v73 = vadd.f32 0.0, %v72
    %74 = vdwg.mxu0
    %v76 = vsel %vm51, %v41, 0
    %78 = vmatpush.msra.mxu0 0.0
    %79 = vmatpush.msra.mxu0 0.0
    %80 = vmatpush.msra.mxu0 0.0
    %81 = vmatpush.msra.mxu0 0.0
    %82 = vmatpush.msra.mxu0 0.0
    %83 = vmatpush.msra.mxu0 0.0
    %84 = vmatpush.msra.mxu0 0.0
    %85 = vmatpush.msra.mxu0 0.0
    %86 = vmatpush.msra.mxu0 0.0
    %87 = vmatpush.msra.mxu0 0.0
    %88 = vmatpush.msra.mxu0 0.0
    %89 = vmatpush.msra.mxu0 0.0
    %90 = vmatpush.msra.mxu0 %v46
    %91 = vmatpush.msra.mxu0 %v45
    %92 = vmatpush.msra.mxu0 %v44
    %93 = vmatpush.msra.mxu0 %v43
    %94 = vmatmul.f32.gmra.mxu0 %v76
    %v95 = vpop.f32.mrf.mxu0
    %v96 = vadd.f32 %v73, %v95
    %97 = vdwg.mxu0
    %v98 = vld [vmem:[%s4] sm:$0x1]
    %v100 = vperm.slane %v98, 0
    %v102 = vadd.f32 %v96, %v100
    %v103 = vtanh.pop %v102
    %v104 = vld [vmem:[%s5] sm:$0xff]
    %v105 = vld [vmem:[%s5 + $0x8] sm:$0xff]
    %v106 = vld [vmem:[%s5 + $0x10] sm:$0xff]
    %v107 = vld [vmem:[%s5 + $0x18] sm:$0xff]
    %v108 = vld [vmem:[%s5 + $0x20] sm:$0xff]
    %v109 = vld [vmem:[%s5 + $0x28] sm:$0xff]
    %v110 = vld [vmem:[%s5 + $0x30] sm:$0xff]
    %v111 = vld [vmem:[%s5 + $0x38] sm:$0xff]
    %v112 = vld [vmem:[%s6] sm:$0x1]
    %v114 = vperm.slane %v112, 0
    %vm116 = vcmask 523264
    %v118 = vsel %vm116, %v103, 0
    %120 = vmatpush.msra.mxu0 0.0
    %121 = vmatpush.msra.mxu0 0.0
    %122 = vmatpush.msra.mxu0 0.0
    %123 = vmatpush.msra.mxu0 0.0
    %124 = vmatpush.msra.mxu0 0.0
    %125 = vmatpush.msra.mxu0 0.0
    %126 = vmatpush.msra.mxu0 0.0
    %127 = vmatpush.msra.mxu0 0.0
    %128 = vmatpush.msra.mxu0 %v111
    %129 = vmatpush.msra.mxu0 %v110
    %130 = vmatpush.msra.mxu0 %v109
    %131 = vmatpush.msra.mxu0 %v108
    %132 = vmatpush.msra.mxu0 %v107
    %133 = vmatpush.msra.mxu0 %v106
    %134 = vmatpush.msra.mxu0 %v105
    %135 = vmatpush.msra.mxu0 %v104
    %136 = vmatmul.f32.gmra.mxu0 %v118
    %v137 = vpop.f32.mrf.mxu0
    %v138 = vadd.f32 %v114, %v137
    %139 = vdwg.mxu0
    %v140 = vsel %vm51, %v138, -inf
    %141 = vmax.xlane.f32.xlu0 %v140
    %v142 = vpop.xlane.xlu0 %141
    %v143 = vsub.f32 %v138, %v142
    %v144 = vmul.f32 %v143, 1.442695
    %v145 = vpow.pop %v144
    %v146 = vsel %vm51, %v145, 0.0
    %147 = vadd.xlane.f32.xlu0 %v146
    %v148 = vpop.xlane.xlu0 %147
    %v149 = vrcp.pop %v148
    %v150 = vmul.f32 %v145, %v149
    %v151 = vmul.f32 %v150, %v41
    %v152 = vadd.f32 %v151, %v42
    %153 = vst.msk [vmem:[#allocation5] sm:$0xff] %vm51, %v152
    // Predicated region
    $region34: #{tpu_custom_call.1} parent=1 // pred_check
      _
    $region35: #{tpu_custom_call.1} parent=1 // pred_check_branch
      %155 = sbr.rel (0) target = $region37
    $region36: #{tpu_custom_call.1} parent=1 // pred_region
      %157 = vsyncadd [#allocation4], 0
      %s159 = sshll.u32 [#allocation5], 4
      %s160 = int_to_ptr.vmem [resolvable:$true] %s159
      %s161 = sshll.u32 %s7, 4
      %s162 = int_to_ptr.hbm [resolvable:$true] %s161
      %164 = dma.vmem_to_hbm [thread:$0]  %s160, 128, %s162, [#allocation4]
    $region37: #{tpu_custom_call.1} parent=1 // pred_fallthru
      _
    // Predicated region
    $region38: #{tpu_custom_call.1} parent=1 // pred_check
      _
    $region39: #{tpu_custom_call.1} parent=1 // pred_check_branch
      %166 = sbr.rel (0) target = $region41
    $region40: #{tpu_custom_call.1} parent=1 // pred_region
      %168 = dma.done [#allocation4], 128
    $region41: #{tpu_custom_call.1} parent=1 // pred_fallthru
      _
    %169 = vsyncpa [#allocation3], 1
    %170 = vsyncpa [#allocation4], 1

</llo_original>
